<compile_context>
chip_gen: v6e
topology: v6e:2x2x1
jax: 0.10.0
libtpu: 0.0.40
codegen_flags: <defaults>
</compile_context>

<pallas_src>
import math
import jax
import jax.numpy as jnp
from jax import lax
from jax.experimental import pallas as pl

# ---------------------------------------------------------------------------
# problem sizes (small, consistent with the forward pass)
# ---------------------------------------------------------------------------
B = 2            # batch
C = 3            # image channels (RGB)
H = W = 16       # spatial
P = 4            # patch size
T = (H // P) * (W // P)          # tokens per image = 16
PATCH_DIM = P * P * C            # 48
ENC_IN = PATCH_DIM + 3 + 3       # fused [patch | ray | cam] feature width = 54
QRY_IN = 6                       # [target_cam | target_ray]
D = 32           # latent width
DH = 64          # MLP hidden width
Q = 8            # number of target query rays
OUT_C = 3        # RGB output per ray
PAD = 128        # lane-dense padded width
OUT_PAD = 128

BT = B * T       # 32 encoder rows
BQ = B * Q       # 16 decoder rows

# ---------------------------------------------------------------------------
# packed parameter-slab row offsets (8-row aligned, 128 lanes wide, f32)
# ---------------------------------------------------------------------------
R_WENC  = 0                 # [PAD, D]   encoder input projection (rows 54..127 zero)
R_BENC  = R_WENC + PAD      # [1,  D]    encoder bias
R_WQRY  = R_BENC + 8        # [PAD, D]   fused query proj (w_qry @ w_q, 1/sqrt(D) folded)
R_WHK   = R_WQRY + PAD      # [D,  D]    fused h->k  (w_enc @ w_k)
R_WHV   = R_WHK + D         # [D,  D]    fused h->v  (w_enc @ w_v)
R_BK    = R_WHV + D         # [1,  D]    b_enc @ w_k
R_BV    = R_BK + 8          # [1,  D]    b_enc @ w_v
R_WOW1  = R_BV + 8          # [D,  DH]   fused att proj + MLP-in  (w_o @ w1)
R_B1    = R_WOW1 + D        # [1,  DH]
R_W2    = R_B1 + 8          # [DH, 128]  MLP-out (only first OUT_C lanes real)
R_B2    = R_W2 + DH         # [1,  128]
R_ABIAS = R_B2 + 8          # [BQ, BT]   additive block-diagonal batch mask (0 / -1e30)
R_TOTAL = ((R_ABIAS + BQ) + 7) & ~7   # 472

_FLOPS = 2 * (BT * PAD * D + BQ * PAD * D + 2 * BT * D * D
              + BQ * D * BT + BQ * BT * D + BQ * D * DH + BQ * DH * OUT_PAD)
_TRANS = BQ * BT + BQ * OUT_PAD
_BYTES = (R_TOTAL * PAD + (BT + BQ) * PAD + BQ * OUT_PAD) * 4


# ---------------------------------------------------------------------------
# Fused kernel: encoder + decoder_att (cross attention) + decoder_rp + sigmoid
# Whole batch in one grid-free invocation; everything resident in VMEM/vregs.
# ---------------------------------------------------------------------------
def fused_kernel(act_ref, p_ref, out_ref):
    bf16 = jnp.bfloat16

    enc_in = act_ref[0:BT, :].astype(bf16)              # [BT, 128]  lane-dense, zero-padded
    qfeat = act_ref[BT:BT + BQ, :].astype(bf16)          # [BQ, 128]

    # ---------------- encoder:  h = ReLU(enc_in @ W + b)  (z never materialized) --------
    h = jnp.dot(enc_in, p_ref[R_WENC:R_WENC + PAD, :D].astype(bf16),
                preferred_element_type=jnp.float32) + p_ref[R_BENC:R_BENC + 1, :D]
    h = jnp.maximum(h, 0.0)                               # [BT, D] f32
    hb = h.astype(bf16)

    # ---------------- decoder cross-attention ------------------------------------------
    q = jnp.dot(qfeat, p_ref[R_WQRY:R_WQRY + PAD, :D].astype(bf16),
                preferred_element_type=jnp.float32)       # [BQ, D]  (w_qry@w_q, scale folded)
    k = jnp.dot(hb, p_ref[R_WHK:R_WHK + D, :D].astype(bf16),
                preferred_element_type=jnp.float32) + p_ref[R_BK:R_BK + 1, :D]
    v = jnp.dot(hb, p_ref[R_WHV:R_WHV + D, :D].astype(bf16),
                preferred_element_type=jnp.float32) + p_ref[R_BV:R_BV + 1, :D]

    # q·kᵀ without materializing the transpose: contract dim 1 of both operands
    s = lax.dot_general(q.astype(bf16), k.astype(bf16),
                        dimension_numbers=(((1,), (1,)), ((), ())),
                        preferred_element_type=jnp.float32)          # [BQ, BT]
    # precomputed additive block-diagonal batch mask (0 within batch, -1e30 across)
    s = s + p_ref[R_ABIAS:R_ABIAS + BQ, :BT]

    m = jnp.max(s, axis=-1, keepdims=True)
    p = jnp.exp(s - m)
    p = p * pl.reciprocal(jnp.sum(p, axis=-1, keepdims=True), approx=True)

    att = jnp.dot(p.astype(bf16), v.astype(bf16),
                  preferred_element_type=jnp.float32)                # [BQ, D]

    # ---------------- decoder_rp (MLP head, w_o folded into w1) + sigmoid ---------------
    hm = jnp.dot(att.astype(bf16), p_ref[R_WOW1:R_WOW1 + D, :DH].astype(bf16),
                 preferred_element_type=jnp.float32) + p_ref[R_B1:R_B1 + 1, :DH]
    hm = jnp.maximum(hm, 0.0)

    logits = jnp.dot(hm.astype(bf16), p_ref[R_W2:R_W2 + DH, :].astype(bf16),
                     preferred_element_type=jnp.float32) + p_ref[R_B2:R_B2 + 1, :]
    out_ref[...] = jax.nn.sigmoid(logits)                            # [BQ, 128] lane-dense


def run_fused(act_slab, param_slab):
    # No grid: single invocation, whole arrays as VMEM blocks (~270 KB footprint).
    # TODO(synk): for large per-call batches on v7x, add a row-tile grid axis with
    # dimension_semantics=("parallel",) to use both TensorCores.
    return pl.pallas_call(
        fused_kernel,
        out_shape=jax.ShapeDtypeStruct((BQ, OUT_PAD), jnp.float32),
        cost_estimate=pl.CostEstimate(flops=_FLOPS, transcendentals=_TRANS,
                                      bytes_accessed=_BYTES),
    )(act_slab, param_slab)


# ---------------------------------------------------------------------------
# Glue: NCHW -> patches, ray pooling, lane-dense activation slab, full forward (jitted)
# ---------------------------------------------------------------------------
def extract_patches_nchw(x):
    # x: [B, C, H, W]  ->  [B, T, P*P*C]
    b, c, h, w = x.shape
    x = x.reshape(b, c, h // P, P, w // P, P)
    x = jnp.transpose(x, (0, 2, 4, 3, 5, 1))       # [B, H/P, W/P, P, P, C]
    return x.reshape(b, (h // P) * (w // P), P * P * c)


def pool_rays(rays):
    # rays: [B, H, W, 3] -> per-patch mean [B, T, 3]
    b, h, w, c = rays.shape
    r = rays.reshape(b, h // P, P, w // P, P, c)
    r = r.mean(axis=(2, 4))                        # [B, H/P, W/P, 3]
    return r.reshape(b, (h // P) * (w // P), c)


@jax.jit
def generic_profile_forward(batch, param_slab):
    # encoder input: [patch | ray_mean | cam] fused feature, batch folded into rows
    patches = extract_patches_nchw(batch["input_images"])                         # [B, T, 48]
    ray_means = pool_rays(batch["input_rays"])                                    # [B, T, 3]
    cam = jnp.broadcast_to(batch["input_camera_pos"][:, None, :], (B, T, 3))      # [B, T, 3]
    enc_feat = jnp.concatenate([patches, ray_means, cam], axis=-1).reshape(BT, ENC_IN)

    # decoder query features: [target_cam | target_ray], batch folded into rows
    tgt_cam = jnp.broadcast_to(batch["target_camera_pos"][:, None, :], (B, Q, 3))
    qfeat = jnp.concatenate([tgt_cam, batch["target_rays"]], axis=-1).reshape(BQ, QRY_IN)

    # single lane-dense activation slab (zero-padded to 128 lanes)
    act = jnp.zeros((BT + BQ, PAD), jnp.float32)
    act = act.at[:BT, :ENC_IN].set(enc_feat)
    act = act.at[BT:, :QRY_IN].set(qfeat)

    out = run_fused(act, param_slab)                                              # [BQ, 128]
    pred_pixels = out[:, :OUT_C].reshape(B, Q, OUT_C)
    extras = {}                                    # matches GenericProfile._decoder
    return pred_pixels, extras


# ---------------------------------------------------------------------------
# Deterministic parameter init: weights algebraically fused and packed into ONE
# 128-lane-padded f32 slab (single DMA into the kernel).
# ---------------------------------------------------------------------------
def init_params(key):
    ks = jax.random.split(key, 12)

    def lin(k, fan_in, shape):
        return (jax.random.normal(k, shape, jnp.float32) / math.sqrt(fan_in)).astype(jnp.float32)

    # encoder input projection, fused along the input axis: [patch | ray | cam]
    w_patch = lin(ks[0], PATCH_DIM, (PATCH_DIM, D))
    w_ray = lin(ks[1], 3, (3, D))
    w_cam = lin(ks[2], 3, (3, D))
    w_enc_in = jnp.concatenate([w_patch, w_ray, w_cam], axis=0)      # [54, D]
    b_enc_in = jnp.zeros((D,), jnp.float32)

    w_enc = lin(ks[3], D, (D, D))                                    # encoder 2nd layer
    b_enc = jnp.zeros((D,), jnp.float32)

    # query path: w_qry @ w_q fused, 1/sqrt(D) attention scale folded in
    w_qry = lin(ks[4], QRY_IN, (QRY_IN, D))
    w_q = lin(ks[5], D, (D, D)) * jnp.float32(1.0 / math.sqrt(D))
    w_qry_q = w_qry @ w_q                                            # [6, D]

    # K/V path: w_enc folded through (z never materialized in the kernel)
    w_k = lin(ks[6], D, (D, D))
    w_v = lin(ks[7], D, (D, D))
    w_hk = w_enc @ w_k                                               # [D, D]
    w_hv = w_enc @ w_v                                               # [D, D]
    b_k = b_enc @ w_k                                                # [D]
    b_v = b_enc @ w_v                                                # [D]

    # output projection folded into MLP first layer
    w_o = lin(ks[8], D, (D, D))
    w1 = lin(ks[9], D, (D, DH))
    w_ow1 = w_o @ w1                                                 # [D, DH]
    b1 = jnp.zeros((DH,), jnp.float32)

    w2_real = lin(ks[10], DH, (DH, OUT_C))                           # [DH, 3]
    b2 = jnp.zeros((OUT_PAD,), jnp.float32)

    # additive block-diagonal batch mask (queries of batch b attend only to tokens of b)
    row_b = jnp.arange(BQ)[:, None] // Q
    col_b = jnp.arange(BT)[None, :] // T
    attn_bias = jnp.where(row_b == col_b, 0.0, -1e30).astype(jnp.float32)   # [BQ, BT]

    slab = jnp.zeros((R_TOTAL, PAD), jnp.float32)
    slab = slab.at[R_WENC:R_WENC + ENC_IN, :D].set(w_enc_in)
    slab = slab.at[R_BENC, :D].set(b_enc_in)
    slab = slab.at[R_WQRY:R_WQRY + QRY_IN, :D].set(w_qry_q)
    slab = slab.at[R_WHK:R_WHK + D, :D].set(w_hk)
    slab = slab.at[R_WHV:R_WHV + D, :D].set(w_hv)
    slab = slab.at[R_BK, :D].set(b_k)
    slab = slab.at[R_BV, :D].set(b_v)
    slab = slab.at[R_WOW1:R_WOW1 + D, :DH].set(w_ow1)
    slab = slab.at[R_B1, :DH].set(b1)
    slab = slab.at[R_W2:R_W2 + DH, :OUT_C].set(w2_real)
    slab = slab.at[R_B2, :].set(b2)
    slab = slab.at[R_ABIAS:R_ABIAS + BQ, :BT].set(attn_bias)
    return slab


if __name__ == "__main__":
    key = jax.random.PRNGKey(0)
    k_img, k_icam, k_iray, k_tcam, k_tray, k_par = jax.random.split(key, 6)

    batch = {
        "input_images":      jax.random.normal(k_img,  (B, C, H, W), jnp.float32),  # NCHW
        "input_camera_pos":  jax.random.normal(k_icam, (B, 3), jnp.float32),
        "input_rays":        jax.random.normal(k_iray, (B, H, W, 3), jnp.float32),
        "target_camera_pos": jax.random.normal(k_tcam, (B, 3), jnp.float32),
        "target_rays":       jax.random.normal(k_tray, (B, Q, 3), jnp.float32),
    }
    param_slab = init_params(k_par)

    pred_pixels, extras = generic_profile_forward(batch, param_slab)
    pred_pixels = jax.block_until_ready(pred_pixels)

    assert pred_pixels.shape == (B, Q, OUT_C)
    assert bool(jnp.all((pred_pixels >= 0.0) & (pred_pixels <= 1.0)))
    assert bool(jnp.all(jnp.isfinite(pred_pixels)))
    assert isinstance(extras, dict) and not extras
    # TODO(synk): time_interactive / torch.cuda.reset_peak_memory_stats are host-side
    # profiling utilities with no Pallas compute equivalent; not implemented.
    print("KERNEL_OK")
</pallas_src>

<mosaic_0001>
module attributes {stable_mosaic.version = 11 : i64} {
  func.func @fused_kernel(%arg0: memref<48x128xf32, #tpu.memory_space<vmem>>, %arg1: memref<472x128xf32, #tpu.memory_space<vmem>>, %arg2: memref<16x128xf32, #tpu.memory_space<vmem>>) attributes {dimension_semantics = [], scalar_prefetch = 0 : i64, scratch_operands = 0 : i64, tpu.core_type = #tpu.core_type<tc>} {
    %c0 = arith.constant 0 : index
    %c0_0 = arith.constant 0 : index
    %0 = vector.load %arg0[%c0, %c0_0] : memref<48x128xf32, #tpu.memory_space<vmem>>, vector<32x128xf32>
    %1 = arith.truncf %0 : vector<32x128xf32> to vector<32x128xbf16>
    %c32 = arith.constant 32 : index
    %c0_1 = arith.constant 0 : index
    %2 = vector.load %arg0[%c32, %c0_1] : memref<48x128xf32, #tpu.memory_space<vmem>>, vector<16x128xf32>
    %3 = arith.truncf %2 : vector<16x128xf32> to vector<16x128xbf16>
    %c0_2 = arith.constant 0 : index
    %c0_3 = arith.constant 0 : index
    %4 = vector.load %arg1[%c0_2, %c0_3] : memref<472x128xf32, #tpu.memory_space<vmem>>, vector<128x32xf32>
    %5 = arith.truncf %4 : vector<128x32xf32> to vector<128x32xbf16>
    %cst = arith.constant dense<0.000000e+00> : vector<32x32xf32>
    %6 = tpu.matmul %1, %5, %cst {dimension_numbers = #tpu.dot_dimension_numbers<[1], [0], [0], [1], [0, 0, 1, 1], [], []>} : vector<32x128xbf16>, vector<128x32xbf16>, vector<32x32xf32> -> vector<32x32xf32>
    %c128 = arith.constant 128 : index
    %c0_4 = arith.constant 0 : index
    %7 = vector.load %arg1[%c128, %c0_4] : memref<472x128xf32, #tpu.memory_space<vmem>>, vector<1x32xf32>
    %8 = vector.broadcast %7 : vector<1x32xf32> to vector<32x32xf32>
    %9 = arith.addf %6, %8 : vector<32x32xf32>
    %cst_5 = arith.constant 0.000000e+00 : f32
    %10 = vector.broadcast %cst_5 : f32 to vector<32x32xf32>
    %11 = arith.maximumf %9, %10 : vector<32x32xf32>
    %12 = arith.truncf %11 : vector<32x32xf32> to vector<32x32xbf16>
    %c136 = arith.constant 136 : index
    %c0_6 = arith.constant 0 : index
    %13 = vector.load %arg1[%c136, %c0_6] : memref<472x128xf32, #tpu.memory_space<vmem>>, vector<128x32xf32>
    %14 = arith.truncf %13 : vector<128x32xf32> to vector<128x32xbf16>
    %cst_7 = arith.constant dense<0.000000e+00> : vector<16x32xf32>
    %15 = tpu.matmul %3, %14, %cst_7 {dimension_numbers = #tpu.dot_dimension_numbers<[1], [0], [0], [1], [0, 0, 1, 1], [], []>} : vector<16x128xbf16>, vector<128x32xbf16>, vector<16x32xf32> -> vector<16x32xf32>
    %c264 = arith.constant 264 : index
    %c0_8 = arith.constant 0 : index
    %16 = vector.load %arg1[%c264, %c0_8] : memref<472x128xf32, #tpu.memory_space<vmem>>, vector<32x32xf32>
    %17 = arith.truncf %16 : vector<32x32xf32> to vector<32x32xbf16>
    %cst_9 = arith.constant dense<0.000000e+00> : vector<32x32xf32>
    %18 = tpu.matmul %12, %17, %cst_9 {dimension_numbers = #tpu.dot_dimension_numbers<[1], [0], [0], [1], [0, 0, 1, 1], [], []>} : vector<32x32xbf16>, vector<32x32xbf16>, vector<32x32xf32> -> vector<32x32xf32>
    %c328 = arith.constant 328 : index
    %c0_10 = arith.constant 0 : index
    %19 = vector.load %arg1[%c328, %c0_10] : memref<472x128xf32, #tpu.memory_space<vmem>>, vector<1x32xf32>
    %20 = vector.broadcast %19 : vector<1x32xf32> to vector<32x32xf32>
    %21 = arith.addf %18, %20 : vector<32x32xf32>
    %c296 = arith.constant 296 : index
    %c0_11 = arith.constant 0 : index
    %22 = vector.load %arg1[%c296, %c0_11] : memref<472x128xf32, #tpu.memory_space<vmem>>, vector<32x32xf32>
    %23 = arith.truncf %22 : vector<32x32xf32> to vector<32x32xbf16>
    %cst_12 = arith.constant dense<0.000000e+00> : vector<32x32xf32>
    %24 = tpu.matmul %12, %23, %cst_12 {dimension_numbers = #tpu.dot_dimension_numbers<[1], [0], [0], [1], [0, 0, 1, 1], [], []>} : vector<32x32xbf16>, vector<32x32xbf16>, vector<32x32xf32> -> vector<32x32xf32>
    %c336 = arith.constant 336 : index
    %c0_13 = arith.constant 0 : index
    %25 = vector.load %arg1[%c336, %c0_13] : memref<472x128xf32, #tpu.memory_space<vmem>>, vector<1x32xf32>
    %26 = vector.broadcast %25 : vector<1x32xf32> to vector<32x32xf32>
    %27 = arith.addf %24, %26 : vector<32x32xf32>
    %28 = arith.truncf %15 : vector<16x32xf32> to vector<16x32xbf16>
    %29 = arith.truncf %21 : vector<32x32xf32> to vector<32x32xbf16>
    %cst_14 = arith.constant dense<0.000000e+00> : vector<16x32xf32>
    %30 = tpu.matmul %28, %29, %cst_14 {dimension_numbers = #tpu.dot_dimension_numbers<[1], [1], [0], [0], [0, 0, 1, 0], [], []>} : vector<16x32xbf16>, vector<32x32xbf16>, vector<16x32xf32> -> vector<16x32xf32>
    %c456 = arith.constant 456 : index
    %c0_15 = arith.constant 0 : index
    %31 = vector.load %arg1[%c456, %c0_15] : memref<472x128xf32, #tpu.memory_space<vmem>>, vector<16x32xf32>
    %32 = arith.addf %30, %31 : vector<16x32xf32>
    %cst_16 = arith.constant dense<0xFF800000> : vector<16xf32>
    %33 = vector.multi_reduction <maximumf>, %32, %cst_16 [1] : vector<16x32xf32> to vector<16xf32>
    %34 = vector.shape_cast %33 : vector<16xf32> to vector<16x1xf32>
    %35 = vector.broadcast %34 : vector<16x1xf32> to vector<16x32xf32>
    %36 = arith.subf %32, %35 : vector<16x32xf32>
    %37 = math.exp %36 : vector<16x32xf32>
    %cst_17 = arith.constant dense<0.000000e+00> : vector<16xf32>
    %38 = vector.multi_reduction <add>, %37, %cst_17 [1] : vector<16x32xf32> to vector<16xf32>
    %39 = vector.shape_cast %38 : vector<16xf32> to vector<16x1xf32>
    %40 = tpu.reciprocal %39 {approx = true} : vector<16x1xf32> -> vector<16x1xf32>
    %41 = vector.broadcast %40 : vector<16x1xf32> to vector<16x32xf32>
    %42 = arith.mulf %37, %41 : vector<16x32xf32>
    %43 = arith.truncf %42 : vector<16x32xf32> to vector<16x32xbf16>
    %44 = arith.truncf %27 : vector<32x32xf32> to vector<32x32xbf16>
    %cst_18 = arith.constant dense<0.000000e+00> : vector<16x32xf32>
    %45 = tpu.matmul %43, %44, %cst_18 {dimension_numbers = #tpu.dot_dimension_numbers<[1], [0], [0], [1], [0, 0, 1, 1], [], []>} : vector<16x32xbf16>, vector<32x32xbf16>, vector<16x32xf32> -> vector<16x32xf32>
    %46 = arith.truncf %45 : vector<16x32xf32> to vector<16x32xbf16>
    %c344 = arith.constant 344 : index
    %c0_19 = arith.constant 0 : index
    %47 = vector.load %arg1[%c344, %c0_19] : memref<472x128xf32, #tpu.memory_space<vmem>>, vector<32x64xf32>
    %48 = arith.truncf %47 : vector<32x64xf32> to vector<32x64xbf16>
    %cst_20 = arith.constant dense<0.000000e+00> : vector<16x64xf32>
    %49 = tpu.matmul %46, %48, %cst_20 {dimension_numbers = #tpu.dot_dimension_numbers<[1], [0], [0], [1], [0, 0, 1, 1], [], []>} : vector<16x32xbf16>, vector<32x64xbf16>, vector<16x64xf32> -> vector<16x64xf32>
    %c376 = arith.constant 376 : index
    %c0_21 = arith.constant 0 : index
    %50 = vector.load %arg1[%c376, %c0_21] : memref<472x128xf32, #tpu.memory_space<vmem>>, vector<1x64xf32>
    %51 = vector.broadcast %50 : vector<1x64xf32> to vector<16x64xf32>
    %52 = arith.addf %49, %51 : vector<16x64xf32>
    %cst_22 = arith.constant 0.000000e+00 : f32
    %53 = vector.broadcast %cst_22 : f32 to vector<16x64xf32>
    %54 = arith.maximumf %52, %53 : vector<16x64xf32>
    %55 = arith.truncf %54 : vector<16x64xf32> to vector<16x64xbf16>
    %c384 = arith.constant 384 : index
    %c0_23 = arith.constant 0 : index
    %56 = vector.load %arg1[%c384, %c0_23] : memref<472x128xf32, #tpu.memory_space<vmem>>, vector<64x128xf32>
    %57 = arith.truncf %56 : vector<64x128xf32> to vector<64x128xbf16>
    %cst_24 = arith.constant dense<0.000000e+00> : vector<16x128xf32>
    %58 = tpu.matmul %55, %57, %cst_24 {dimension_numbers = #tpu.dot_dimension_numbers<[1], [0], [0], [1], [0, 0, 1, 1], [], []>} : vector<16x64xbf16>, vector<64x128xbf16>, vector<16x128xf32> -> vector<16x128xf32>
    %c448 = arith.constant 448 : index
    %c0_25 = arith.constant 0 : index
    %59 = vector.load %arg1[%c448, %c0_25] : memref<472x128xf32, #tpu.memory_space<vmem>>, vector<1x128xf32>
    %60 = vector.broadcast %59 : vector<1x128xf32> to vector<16x128xf32>
    %61 = arith.addf %58, %60 : vector<16x128xf32>
    %62 = arith.negf %61 : vector<16x128xf32>
    %63 = math.exp %62 : vector<16x128xf32>
    %cst_26 = arith.constant 1.000000e+00 : f32
    %64 = vector.broadcast %cst_26 : f32 to vector<16x128xf32>
    %65 = arith.addf %64, %63 : vector<16x128xf32>
    %66 = arith.divf %64, %65 : vector<16x128xf32>
    %c0_27 = arith.constant 0 : index
    %c0_28 = arith.constant 0 : index
    %67 = vector.load %arg2[%c0_27, %c0_28] : memref<16x128xf32, #tpu.memory_space<vmem>>, vector<16x128xf32>
    tpu.vector_store %arg2[%c0_27, %c0_28], %66 {strides = array<i32>} : memref<16x128xf32, #tpu.memory_space<vmem>>, vector<16x128xf32>,
    return
  }
}

</mosaic_0001>

<llo_original>
// kernel: generic_profile_forward.1
$region0: #{generic_profile_forward.1}
  #allocation0 [shape = 'u32[]', space=smem, size = 0x4, offset = 0x4, fixed_abs, tag = 'smem constant byte address 0x4 - core index']
  #allocation1 [shape = 'u32[144,128]{1,0:T(1,128)}', space=vmem, size = 0x12000, scoped, tag = 'internal scratch']
  %s0 = inlined_call_operand.vmem [shape: f32[48,128], index: 0, kind: input, shape index: {}]
  %s1 = inlined_call_operand.vmem [shape: f32[472,128], index: 1, kind: input, shape index: {}]
  %s2 = inlined_call_operand.vmem [shape: f32[16,128], index: 2, kind: output, shape index: {}]
  %s3 = sld [smem:[#allocation0]]
  $region18: #{generic_profile_forward.1} parent=0
    _
  %s5 = ssub.s32 1, %s3
  %s6 = scalar_select 0, %s5, %s3
  // Predicated region
  $region2: #{generic_profile_forward.1} parent=0 // pred_check
    _
  $region3: #{generic_profile_forward.1} parent=0 // pred_check_branch
    %8 = sbr.rel (0) target = $region5
  $region4: #{generic_profile_forward.1} parent=0 // pred_region
    _
  $region5: #{generic_profile_forward.1} parent=0 // pred_fallthru
    _
  // Predicated region
  $region6: #{generic_profile_forward.1} parent=0 // pred_check
    _
  $region7: #{generic_profile_forward.1} parent=0 // pred_check_branch
    %10 = sbr.rel (0) target = $region9
  $region8: #{generic_profile_forward.1} parent=0 // pred_region
    _
  $region9: #{generic_profile_forward.1} parent=0 // pred_fallthru
    _
  %v12 = vld [vmem:[%s0] sm:$0xff]
  %v13 = vld [vmem:[%s0 + $0x8] sm:$0xff]
  %v14 = vld [vmem:[%s0 + $0x10] sm:$0xff]
  %v15 = vld [vmem:[%s0 + $0x18] sm:$0xff]
  %v16 = vpack.c.bf16 %v13, %v12
  %v17 = vpack.c.bf16 %v15, %v14
  %v18 = vld [vmem:[%s0 + $0x20] sm:$0xff]
  %v19 = vld [vmem:[%s0 + $0x28] sm:$0xff]
  %v20 = vpack.c.bf16 %v19, %v18
  %v21 = vld [vmem:[%s1] sm:$0xff]
  %v22 = vld [vmem:[%s1 + $0x8] sm:$0xff]
  %v23 = vld [vmem:[%s1 + $0x10] sm:$0xff]
  %v24 = vld [vmem:[%s1 + $0x18] sm:$0xff]
  %v25 = vld [vmem:[%s1 + $0x20] sm:$0xff]
  %v26 = vld [vmem:[%s1 + $0x28] sm:$0xff]
  %v27 = vld [vmem:[%s1 + $0x30] sm:$0xff]
  %v28 = vld [vmem:[%s1 + $0x38] sm:$0xff]
  %v29 = vld [vmem:[%s1 + $0x40] sm:$0xff]
  %v30 = vld [vmem:[%s1 + $0x48] sm:$0xff]
  %v31 = vld [vmem:[%s1 + $0x50] sm:$0xff]
  %v32 = vld [vmem:[%s1 + $0x58] sm:$0xff]
  %v33 = vld [vmem:[%s1 + $0x60] sm:$0xff]
  %v34 = vld [vmem:[%s1 + $0x68] sm:$0xff]
  %v35 = vld [vmem:[%s1 + $0x70] sm:$0xff]
  %v36 = vld [vmem:[%s1 + $0x78] sm:$0xff]
  %v37 = vpack.c.bf16 %v22, %v21
  %v38 = vpack.c.bf16 %v24, %v23
  %v39 = vpack.c.bf16 %v26, %v25
  %v40 = vpack.c.bf16 %v28, %v27
  %v41 = vpack.c.bf16 %v30, %v29
  %v42 = vpack.c.bf16 %v32, %v31
  %v43 = vpack.c.bf16 %v34, %v33
  %v44 = vpack.c.bf16 %v36, %v35
  %v45 = vld [vmem:[%s1 + $0x80] sm:$0x1]
  %v46 = vlaneseq
  %v47 = vshrl.u32 %v46, 7
  %v48 = vsub.s32 0, %v47
  %v49 = vrot.slane %v45, %v48
  %50 = vmatprep.subr.bf16.mxu0 0
  %51 = vmatpush1.bf16.msra.mxu0 %v44
  %52 = vmatprep.subr.bf16.mxu0 0
  %53 = vmatpush1.bf16.msra.mxu0 %v43
  %54 = vmatprep.subr.bf16.mxu0 0
  %55 = vmatpush1.bf16.msra.mxu0 %v42
  %56 = vmatprep.subr.bf16.mxu0 0
  %57 = vmatpush1.bf16.msra.mxu0 %v41
  %58 = vmatprep.subr.bf16.mxu0 0
  %59 = vmatpush1.bf16.msra.mxu0 %v40
  %60 = vmatprep.subr.bf16.mxu0 0
  %61 = vmatpush1.bf16.msra.mxu0 %v39
  %62 = vmatprep.subr.bf16.mxu0 0
  %63 = vmatpush1.bf16.msra.mxu0 %v38
  %64 = vmatprep.subr.bf16.mxu0 0
  %65 = vmatpush1.bf16.msra.mxu0 %v37
  %66 = vmatprep.subr.bf16.mxu0 0
  %67 = vmatpush2.bf16.msra.mxu0 0
  %68 = vmatprep.subr.bf16.mxu0 0
  %69 = vmatpush2.bf16.msra.mxu0 0
  %70 = vmatprep.subr.bf16.mxu0 0
  %71 = vmatpush2.bf16.msra.mxu0 0
  %72 = vmatprep.subr.bf16.mxu0 0
  %73 = vmatpush2.bf16.msra.mxu0 0
  %74 = vmatprep.subr.bf16.mxu0 0
  %75 = vmatpush2.bf16.msra.mxu0 0
  %76 = vmatprep.subr.bf16.mxu0 0
  %77 = vmatpush2.bf16.msra.mxu0 0
  %78 = vmatprep.subr.bf16.mxu0 0
  %79 = vmatpush2.bf16.msra.mxu0 0
  %80 = vmatprep.subr.bf16.mxu0 0
  %81 = vmatpush2.bf16.msra.mxu0 0
  %82 = vmatprep.mubr.bf16.mxu0 0
  %83 = vmatmul.mubr.bf16.gmra.mxu0 %v16
  %v84 = vpop.f32.mrf.mxu0
  %v85 = vadd.f32 %v49, %v84
  %v86 = vpop.f32.mrf.mxu0
  %v87 = vpop.f32.mrf.mxu0
  %v88 = vadd.f32 %v49, %v87
  %v89 = vpop.f32.mrf.mxu0
  %90 = vmatprep.mubr.bf16.mxu0 0
  %91 = vmatmul.mubr.bf16.gmra.mxu0 %v17
  %v92 = vpop.f32.mrf.mxu0
  %v93 = vadd.f32 %v49, %v92
  %v94 = vpop.f32.mrf.mxu0
  %v95 = vpop.f32.mrf.mxu0
  %v96 = vadd.f32 %v49, %v95
  %v97 = vpop.f32.mrf.mxu0
  %98 = vdwg.mxu0
  %v99 = vmax.f32 %v85, 0.0
  %v100 = vmax.f32 %v88, 0.0
  %v101 = vmax.f32 %v93, 0.0
  %v102 = vmax.f32 %v96, 0.0
  %v103 = vpack.c.bf16 %v100, %v99
  %v104 = vpack.c.bf16 %v102, %v101
  %v105 = vld [vmem:[%s1 + $0x88] sm:$0xff]
  %v106 = vld [vmem:[%s1 + $0x90] sm:$0xff]
  %v107 = vld [vmem:[%s1 + $0x98] sm:$0xff]
  %v108 = vld [vmem:[%s1 + $0xa0] sm:$0xff]
  %v109 = vld [vmem:[%s1 + $0xa8] sm:$0xff]
  %v110 = vld [vmem:[%s1 + $0xb0] sm:$0xff]
  %v111 = vld [vmem:[%s1 + $0xb8] sm:$0xff]
  %v112 = vld [vmem:[%s1 + $0xc0] sm:$0xff]
  %v113 = vld [vmem:[%s1 + $0xc8] sm:$0xff]
  %v114 = vld [vmem:[%s1 + $0xd0] sm:$0xff]
  %v115 = vld [vmem:[%s1 + $0xd8] sm:$0xff]
  %v116 = vld [vmem:[%s1 + $0xe0] sm:$0xff]
  %v117 = vld [vmem:[%s1 + $0xe8] sm:$0xff]
  %v118 = vld [vmem:[%s1 + $0xf0] sm:$0xff]
  %v119 = vld [vmem:[%s1 + $0xf8] sm:$0xff]
  %v120 = vld [vmem:[%s1 + $0x100] sm:$0xff]
  %v121 = vpack.c.bf16 %v106, %v105
  %v122 = vpack.c.bf16 %v108, %v107
  %v123 = vpack.c.bf16 %v110, %v109
  %v124 = vpack.c.bf16 %v112, %v111
  %v125 = vpack.c.bf16 %v114, %v113
  %v126 = vpack.c.bf16 %v116, %v115
  %v127 = vpack.c.bf16 %v118, %v117
  %v128 = vpack.c.bf16 %v120, %v119
  %129 = vmatprep.subr.bf16.mxu0 0
  %130 = vmatpush1.bf16.msra.mxu0 %v128
  %131 = vmatprep.subr.bf16.mxu0 0
  %132 = vmatpush1.bf16.msra.mxu0 %v127
  %133 = vmatprep.subr.bf16.mxu0 0
  %134 = vmatpush1.bf16.msra.mxu0 %v126
  %135 = vmatprep.subr.bf16.mxu0 0
  %136 = vmatpush1.bf16.msra.mxu0 %v125
  %137 = vmatprep.subr.bf16.mxu0 0
  %138 = vmatpush1.bf16.msra.mxu0 %v124
  %139 = vmatprep.subr.bf16.mxu0 0
  %140 = vmatpush1.bf16.msra.mxu0 %v123
  %141 = vmatprep.subr.bf16.mxu0 0
  %142 = vmatpush1.bf16.msra.mxu0 %v122
  %143 = vmatprep.subr.bf16.mxu0 0
  %144 = vmatpush1.bf16.msra.mxu0 %v121
  %145 = vmatprep.subr.bf16.mxu0 0
  %146 = vmatpush2.bf16.msra.mxu0 0
  %147 = vmatprep.subr.bf16.mxu0 0
  %148 = vmatpush2.bf16.msra.mxu0 0
  %149 = vmatprep.subr.bf16.mxu0 0
  %150 = vmatpush2.bf16.msra.mxu0 0
  %151 = vmatprep.subr.bf16.mxu0 0
  %152 = vmatpush2.bf16.msra.mxu0 0
  %153 = vmatprep.subr.bf16.mxu0 0
  %154 = vmatpush2.bf16.msra.mxu0 0
  %155 = vmatprep.subr.bf16.mxu0 0
  %156 = vmatpush2.bf16.msra.mxu0 0
  %157 = vmatprep.subr.bf16.mxu0 0
  %158 = vmatpush2.bf16.msra.mxu0 0
  %159 = vmatprep.subr.bf16.mxu0 0
  %160 = vmatpush2.bf16.msra.mxu0 0
  %161 = vmatprep.mubr.bf16.mxu0 0
  %162 = vmatmul.mubr.bf16.gmra.mxu0 %v20
  %v163 = vpop.f32.mrf.mxu0
  %v164 = vadd.f32 0.0, %v163
  %v165 = vpop.f32.mrf.mxu0
  %v166 = vpop.f32.mrf.mxu0
  %v167 = vadd.f32 0.0, %v166
  %v168 = vpop.f32.mrf.mxu0
  %169 = vdwg.mxu0
  %v170 = vld [vmem:[%s1 + $0x108] sm:$0xff]
  %v171 = vld [vmem:[%s1 + $0x110] sm:$0xff]
  %v172 = vld [vmem:[%s1 + $0x118] sm:$0xff]
  %v173 = vld [vmem:[%s1 + $0x120] sm:$0xff]
  %v174 = vpack.c.bf16 %v171, %v170
  %v175 = vpack.c.bf16 %v173, %v172
  %v176 = vld [vmem:[%s1 + $0x148] sm:$0x1]
  %v177 = vlaneseq
  %v178 = vshrl.u32 %v177, 7
  %v179 = vsub.s32 0, %v178
  %v180 = vrot.slane %v176, %v179
  %vm181 = vcmask 261120
  %v183 = vsel %vm181, %v103, 0
  %v186 = vsel %vm181, %v104, 0
  %188 = vmatprep.subr.bf16.mxu0 0
  %189 = vmatpush1.bf16.msra.mxu0 0
  %190 = vmatprep.subr.bf16.mxu0 0
  %191 = vmatpush1.bf16.msra.mxu0 0
  %192 = vmatprep.subr.bf16.mxu0 0
  %193 = vmatpush1.bf16.msra.mxu0 0
  %194 = vmatprep.subr.bf16.mxu0 0
  %195 = vmatpush1.bf16.msra.mxu0 0
  %196 = vmatprep.subr.bf16.mxu0 0
  %197 = vmatpush1.bf16.msra.mxu0 0
  %198 = vmatprep.subr.bf16.mxu0 0
  %199 = vmatpush1.bf16.msra.mxu0 0
  %200 = vmatprep.subr.bf16.mxu0 0
  %201 = vmatpush1.bf16.msra.mxu0 %v175
  %202 = vmatprep.subr.bf16.mxu0 0
  %203 = vmatpush1.bf16.msra.mxu0 %v174
  %204 = vmatprep.subr.bf16.mxu0 0
  %205 = vmatpush2.bf16.msra.mxu0 0
  %206 = vmatprep.subr.bf16.mxu0 0
  %207 = vmatpush2.bf16.msra.mxu0 0
  %208 = vmatprep.subr.bf16.mxu0 0
  %209 = vmatpush2.bf16.msra.mxu0 0
  %210 = vmatprep.subr.bf16.mxu0 0
  %211 = vmatpush2.bf16.msra.mxu0 0
  %212 = vmatprep.subr.bf16.mxu0 0
  %213 = vmatpush2.bf16.msra.mxu0 0
  %214 = vmatprep.subr.bf16.mxu0 0
  %215 = vmatpush2.bf16.msra.mxu0 0
  %216 = vmatprep.subr.bf16.mxu0 0
  %217 = vmatpush2.bf16.msra.mxu0 0
  %218 = vmatprep.subr.bf16.mxu0 0
  %219 = vmatpush2.bf16.msra.mxu0 0
  %220 = vmatprep.mubr.bf16.mxu0 0
  %221 = vmatmul.mubr.bf16.gmra.mxu0 %v183
  %v222 = vpop.f32.mrf.mxu0
  %v223 = vadd.f32 %v180, %v222
  %v224 = vpop.f32.mrf.mxu0
  %v225 = vpop.f32.mrf.mxu0
  %v226 = vadd.f32 %v180, %v225
  %v227 = vpop.f32.mrf.mxu0
  %228 = vmatprep.mubr.bf16.mxu0 0
  %229 = vmatmul.mubr.bf16.gmra.mxu0 %v186
  %v230 = vpop.f32.mrf.mxu0
  %v231 = vadd.f32 %v180, %v230
  %v232 = vpop.f32.mrf.mxu0
  %v233 = vpop.f32.mrf.mxu0
  %v234 = vadd.f32 %v180, %v233
  %v235 = vpop.f32.mrf.mxu0
  %236 = vdwg.mxu0
  %v237 = vld [vmem:[%s1 + $0x128] sm:$0xff]
  %v238 = vld [vmem:[%s1 + $0x130] sm:$0xff]
  %v239 = vld [vmem:[%s1 + $0x138] sm:$0xff]
  %v240 = vld [vmem:[%s1 + $0x140] sm:$0xff]
  %v241 = vpack.c.bf16 %v238, %v237
  %v242 = vpack.c.bf16 %v240, %v239
  %v243 = vld [vmem:[%s1 + $0x150] sm:$0x1]
  %v244 = vlaneseq
  %v245 = vshrl.u32 %v244, 7
  %v246 = vsub.s32 0, %v245
  %v247 = vrot.slane %v243, %v246
  %248 = vmatprep.subr.bf16.mxu0 0
  %249 = vmatpush1.bf16.msra.mxu0 0
  %250 = vmatprep.subr.bf16.mxu0 0
  %251 = vmatpush1.bf16.msra.mxu0 0
  %252 = vmatprep.subr.bf16.mxu0 0
  %253 = vmatpush1.bf16.msra.mxu0 0
  %254 = vmatprep.subr.bf16.mxu0 0
  %255 = vmatpush1.bf16.msra.mxu0 0
  %256 = vmatprep.subr.bf16.mxu0 0
  %257 = vmatpush1.bf16.msra.mxu0 0
  %258 = vmatprep.subr.bf16.mxu0 0
  %259 = vmatpush1.bf16.msra.mxu0 0
  %260 = vmatprep.subr.bf16.mxu0 0
  %261 = vmatpush1.bf16.msra.mxu0 %v242
  %262 = vmatprep.subr.bf16.mxu0 0
  %263 = vmatpush1.bf16.msra.mxu0 %v241
  %264 = vmatprep.subr.bf16.mxu0 0
  %265 = vmatpush2.bf16.msra.mxu0 0
  %266 = vmatprep.subr.bf16.mxu0 0
  %267 = vmatpush2.bf16.msra.mxu0 0
  %268 = vmatprep.subr.bf16.mxu0 0
  %269 = vmatpush2.bf16.msra.mxu0 0
  %270 = vmatprep.subr.bf16.mxu0 0
  %271 = vmatpush2.bf16.msra.mxu0 0
  %272 = vmatprep.subr.bf16.mxu0 0
  %273 = vmatpush2.bf16.msra.mxu0 0
  %274 = vmatprep.subr.bf16.mxu0 0
  %275 = vmatpush2.bf16.msra.mxu0 0
  %276 = vmatprep.subr.bf16.mxu0 0
  %277 = vmatpush2.bf16.msra.mxu0 0
  %278 = vmatprep.subr.bf16.mxu0 0
  %279 = vmatpush2.bf16.msra.mxu0 0
  %280 = vmatprep.mubr.bf16.mxu0 0
  %281 = vmatmul.mubr.bf16.gmra.mxu0 %v183
  %v282 = vpop.f32.mrf.mxu0
  %v283 = vadd.f32 %v247, %v282
  %v284 = vpop.f32.mrf.mxu0
  %v285 = vpop.f32.mrf.mxu0
  %v286 = vadd.f32 %v247, %v285
  %v287 = vpop.f32.mrf.mxu0
  %288 = vmatprep.mubr.bf16.mxu0 0
  %289 = vmatmul.mubr.bf16.gmra.mxu0 %v186
  %v290 = vpop.f32.mrf.mxu0
  %v291 = vadd.f32 %v247, %v290
  %v292 = vpop.f32.mrf.mxu0
  %v293 = vpop.f32.mrf.mxu0
  %v294 = vadd.f32 %v247, %v293
  %v295 = vpop.f32.mrf.mxu0
  %296 = vdwg.mxu0
  %v297 = vpack.c.bf16 %v167, %v164
  %v298 = vpack.c.bf16 %v226, %v223
  %v299 = vpack.c.bf16 %v234, %v231
  %v300 = vld [vmem:[%s1 + $0x1c8] sm:$0xff]
  %v301 = vld [vmem:[%s1 + $0x1d0] sm:$0xff]
  %v303 = vsel %vm181, %v297, 0
  %v306 = vsel %vm181, %v298, 0
  %v309 = vsel %vm181, %v299, 0
  %311 = vmatprep.subr.bf16.mxu0 0
  %312 = vmatpush1.bf16.xpose.msra.mxu0 0
  %313 = vmatprep.subr.bf16.mxu0 0
  %314 = vmatpush1.bf16.xpose.msra.mxu0 0
  %315 = vmatprep.subr.bf16.mxu0 0
  %316 = vmatpush1.bf16.xpose.msra.mxu0 0
  %317 = vmatprep.subr.bf16.mxu0 0
  %318 = vmatpush1.bf16.xpose.msra.mxu0 0
  %319 = vmatprep.subr.bf16.mxu0 0
  %320 = vmatpush1.bf16.xpose.msra.mxu0 0
  %321 = vmatprep.subr.bf16.mxu0 0
  %322 = vmatpush1.bf16.xpose.msra.mxu0 0
  %323 = vmatprep.subr.bf16.mxu0 0
  %324 = vmatpush1.bf16.xpose.msra.mxu0 %v309
  %325 = vmatprep.subr.bf16.mxu0 0
  %326 = vmatpush1.bf16.xpose.msra.mxu0 %v306
  %327 = vmatprep.subr.bf16.mxu0 0
  %328 = vmatpush2.bf16.xpose.msra.mxu0 0
  %329 = vmatprep.subr.bf16.mxu0 0
  %330 = vmatpush2.bf16.xpose.msra.mxu0 0
  %331 = vmatprep.subr.bf16.mxu0 0
  %332 = vmatpush2.bf16.xpose.msra.mxu0 0
  %333 = vmatprep.subr.bf16.mxu0 0
  %334 = vmatpush2.bf16.xpose.msra.mxu0 0
  %335 = vmatprep.subr.bf16.mxu0 0
  %336 = vmatpush2.bf16.xpose.msra.mxu0 0
  %337 = vmatprep.subr.bf16.mxu0 0
  %338 = vmatpush2.bf16.xpose.msra.mxu0 0
  %339 = vmatprep.subr.bf16.mxu0 0
  %340 = vmatpush2.bf16.xpose.msra.mxu0 0
  %341 = vmatprep.subr.bf16.mxu0 0
  %342 = vmatpush2.bf16.xpose.msra.mxu0 0
  %343 = vmatprep.mubr.bf16.mxu0 0
  %344 = vmatmul.mubr.bf16.gmra.mxu0 %v303
  %v345 = vpop.f32.mrf.mxu0
  %v346 = vadd.f32 %v300, %v345
  %v347 = vpop.f32.mrf.mxu0
  %v348 = vpop.f32.mrf.mxu0
  %v349 = vadd.f32 %v301, %v348
  %v350 = vpop.f32.mrf.mxu0
  %351 = vdwg.mxu0
  %v352 = vsel %vm181, %v346, -inf
  %353 = vmax.xlane.f32.xlu0 %v352
  %v354 = vpop.xlane.xlu0 %353
  %v355 = vsel %vm181, %v349, -inf
  %356 = vmax.xlane.f32.xlu0 %v355
  %v357 = vpop.xlane.xlu0 %356
  %v358 = vsub.f32 %v346, %v354
  %v359 = vsub.f32 %v349, %v357
  %v360 = vmul.f32 %v358, 1.442695
  %v361 = vpow.pop %v360
  %v362 = vmul.f32 %v359, 1.442695
  %v363 = vpow.pop %v362
  %v364 = vsel %vm181, %v361, 0.0
  %365 = vadd.xlane.f32.xlu0 %v364
  %v366 = vpop.xlane.xlu0 %365
  %v367 = vsel %vm181, %v363, 0.0
  %368 = vadd.xlane.f32.xlu0 %v367
  %v369 = vpop.xlane.xlu0 %368
  %v370 = vrcp.pop %v366
  %v371 = vrcp.pop %v369
  %v372 = vmul.f32 %v361, %v370
  %v373 = vmul.f32 %v363, %v371
  %v374 = vpack.c.bf16 %v373, %v372
  %v375 = vpack.c.bf16 %v286, %v283
  %v376 = vpack.c.bf16 %v294, %v291
  %v378 = vsel %vm181, %v374, 0
  %380 = vmatprep.subr.bf16.mxu0 0
  %381 = vmatpush1.bf16.msra.mxu0 0
  %382 = vmatprep.subr.bf16.mxu0 0
  %383 = vmatpush1.bf16.msra.mxu0 0
  %384 = vmatprep.subr.bf16.mxu0 0
  %385 = vmatpush1.bf16.msra.mxu0 0
  %386 = vmatprep.subr.bf16.mxu0 0
  %387 = vmatpush1.bf16.msra.mxu0 0
  %388 = vmatprep.subr.bf16.mxu0 0
  %389 = vmatpush1.bf16.msra.mxu0 0
  %390 = vmatprep.subr.bf16.mxu0 0
  %391 = vmatpush1.bf16.msra.mxu0 0
  %392 = vmatprep.subr.bf16.mxu0 0
  %393 = vmatpush1.bf16.msra.mxu0 %v376
  %394 = vmatprep.subr.bf16.mxu0 0
  %395 = vmatpush1.bf16.msra.mxu0 %v375
  %396 = vmatprep.subr.bf16.mxu0 0
  %397 = vmatpush2.bf16.msra.mxu0 0
  %398 = vmatprep.subr.bf16.mxu0 0
  %399 = vmatpush2.bf16.msra.mxu0 0
  %400 = vmatprep.subr.bf16.mxu0 0
  %401 = vmatpush2.bf16.msra.mxu0 0
  %402 = vmatprep.subr.bf16.mxu0 0
  %403 = vmatpush2.bf16.msra.mxu0 0
  %404 = vmatprep.subr.bf16.mxu0 0
  %405 = vmatpush2.bf16.msra.mxu0 0
  %406 = vmatprep.subr.bf16.mxu0 0
  %407 = vmatpush2.bf16.msra.mxu0 0
  %408 = vmatprep.subr.bf16.mxu0 0
  %409 = vmatpush2.bf16.msra.mxu0 0
  %410 = vmatprep.subr.bf16.mxu0 0
  %411 = vmatpush2.bf16.msra.mxu0 0
  %412 = vmatprep.mubr.bf16.mxu0 0
  %413 = vmatmul.mubr.bf16.gmra.mxu0 %v378
  %v414 = vpop.f32.mrf.mxu0
  %v415 = vadd.f32 0.0, %v414
  %v416 = vpop.f32.mrf.mxu0
  %v417 = vpop.f32.mrf.mxu0
  %v418 = vadd.f32 0.0, %v417
  %v419 = vpop.f32.mrf.mxu0
  %420 = vdwg.mxu0
  %v421 = vpack.c.bf16 %v418, %v415
  %v422 = vld [vmem:[%s1 + $0x158] sm:$0xff]
  %v423 = vld [vmem:[%s1 + $0x160] sm:$0xff]
  %v424 = vld [vmem:[%s1 + $0x168] sm:$0xff]
  %v425 = vld [vmem:[%s1 + $0x170] sm:$0xff]
  %v426 = vpack.c.bf16 %v423, %v422
  %v427 = vpack.c.bf16 %v425, %v424
  %v428 = vld [vmem:[%s1 + $0x178] sm:$0x1]
  %v429 = vlaneseq
  %v430 = vshrl.u32 %v429, 7
  %v431 = vsub.s32 0, %v430
  %v432 = vrot.slane %v428, %v431
  %v434 = vsel %vm181, %v421, 0
  %436 = vmatprep.subr.bf16.mxu0 0
  %437 = vmatpush1.bf16.msra.mxu0 0
  %438 = vmatprep.subr.bf16.mxu0 0
  %439 = vmatpush1.bf16.msra.mxu0 0
  %440 = vmatprep.subr.bf16.mxu0 0
  %441 = vmatpush1.bf16.msra.mxu0 0
  %442 = vmatprep.subr.bf16.mxu0 0
  %443 = vmatpush1.bf16.msra.mxu0 0
  %444 = vmatprep.subr.bf16.mxu0 0
  %445 = vmatpush1.bf16.msra.mxu0 0
  %446 = vmatprep.subr.bf16.mxu0 0
  %447 = vmatpush1.bf16.msra.mxu0 0
  %448 = vmatprep.subr.bf16.mxu0 0
  %449 = vmatpush1.bf16.msra.mxu0 %v427
  %450 = vmatprep.subr.bf16.mxu0 0
  %451 = vmatpush1.bf16.msra.mxu0 %v426
  %452 = vmatprep.subr.bf16.mxu0 0
  %453 = vmatpush2.bf16.msra.mxu0 0
  %454 = vmatprep.subr.bf16.mxu0 0
  %455 = vmatpush2.bf16.msra.mxu0 0
  %456 = vmatprep.subr.bf16.mxu0 0
  %457 = vmatpush2.bf16.msra.mxu0 0
  %458 = vmatprep.subr.bf16.mxu0 0
  %459 = vmatpush2.bf16.msra.mxu0 0
  %460 = vmatprep.subr.bf16.mxu0 0
  %461 = vmatpush2.bf16.msra.mxu0 0
  %462 = vmatprep.subr.bf16.mxu0 0
  %463 = vmatpush2.bf16.msra.mxu0 0
  %464 = vmatprep.subr.bf16.mxu0 0
  %465 = vmatpush2.bf16.msra.mxu0 0
  %466 = vmatprep.subr.bf16.mxu0 0
  %467 = vmatpush2.bf16.msra.mxu0 0
  %468 = vmatprep.mubr.bf16.mxu0 0
  %469 = vmatmul.mubr.bf16.gmra.mxu0 %v434
  %v470 = vpop.f32.mrf.mxu0
  %v471 = vadd.f32 %v432, %v470
  %v472 = vpop.f32.mrf.mxu0
  %v473 = vpop.f32.mrf.mxu0
  %v474 = vadd.f32 %v432, %v473
  %v475 = vpop.f32.mrf.mxu0
  %476 = vdwg.mxu0
  %v477 = vmax.f32 %v471, 0.0
  %v478 = vmax.f32 %v474, 0.0
  %v479 = vpack.c.bf16 %v478, %v477
  %v480 = vld [vmem:[%s1 + $0x180] sm:$0xff]
  %v481 = vld [vmem:[%s1 + $0x188] sm:$0xff]
  %v482 = vld [vmem:[%s1 + $0x190] sm:$0xff]
  %v483 = vld [vmem:[%s1 + $0x198] sm:$0xff]
  %v484 = vld [vmem:[%s1 + $0x1a0] sm:$0xff]
  %v485 = vld [vmem:[%s1 + $0x1a8] sm:$0xff]
  %v486 = vld [vmem:[%s1 + $0x1b0] sm:$0xff]
  %v487 = vld [vmem:[%s1 + $0x1b8] sm:$0xff]
  %v488 = vpack.c.bf16 %v481, %v480
  %v489 = vpack.c.bf16 %v483, %v482
  %v490 = vpack.c.bf16 %v485, %v484
  %v491 = vpack.c.bf16 %v487, %v486
  %v492 = vld [vmem:[%s1 + $0x1c0] sm:$0x1]
  %v493 = vlaneseq
  %v494 = vshrl.u32 %v493, 7
  %v495 = vsub.s32 0, %v494
  %v496 = vrot.slane %v492, %v495
  %vm497 = vcmask 523264
  %v499 = vsel %vm497, %v479, 0
  %501 = vmatprep.subr.bf16.mxu0 0
  %502 = vmatpush1.bf16.msra.mxu0 0
  %503 = vmatprep.subr.bf16.mxu0 0
  %504 = vmatpush1.bf16.msra.mxu0 0
  %505 = vmatprep.subr.bf16.mxu0 0
  %506 = vmatpush1.bf16.msra.mxu0 0
  %507 = vmatprep.subr.bf16.mxu0 0
  %508 = vmatpush1.bf16.msra.mxu0 0
  %509 = vmatprep.subr.bf16.mxu0 0
  %510 = vmatpush1.bf16.msra.mxu0 %v491
  %511 = vmatprep.subr.bf16.mxu0 0
  %512 = vmatpush1.bf16.msra.mxu0 %v490
  %513 = vmatprep.subr.bf16.mxu0 0
  %514 = vmatpush1.bf16.msra.mxu0 %v489
  %515 = vmatprep.subr.bf16.mxu0 0
  %516 = vmatpush1.bf16.msra.mxu0 %v488
  %517 = vmatprep.subr.bf16.mxu0 0
  %518 = vmatpush2.bf16.msra.mxu0 0
  %519 = vmatprep.subr.bf16.mxu0 0
  %520 = vmatpush2.bf16.msra.mxu0 0
  %521 = vmatprep.subr.bf16.mxu0 0
  %522 = vmatpush2.bf16.msra.mxu0 0
  %523 = vmatprep.subr.bf16.mxu0 0
  %524 = vmatpush2.bf16.msra.mxu0 0
  %525 = vmatprep.subr.bf16.mxu0 0
  %526 = vmatpush2.bf16.msra.mxu0 0
  %527 = vmatprep.subr.bf16.mxu0 0
  %528 = vmatpush2.bf16.msra.mxu0 0
  %529 = vmatprep.subr.bf16.mxu0 0
  %530 = vmatpush2.bf16.msra.mxu0 0
  %531 = vmatprep.subr.bf16.mxu0 0
  %532 = vmatpush2.bf16.msra.mxu0 0
  %533 = vmatprep.mubr.bf16.mxu0 0
  %534 = vmatmul.mubr.bf16.gmra.mxu0 %v499
  %v535 = vpop.f32.mrf.mxu0
  %v536 = vadd.f32 %v496, %v535
  %v537 = vpop.f32.mrf.mxu0
  %v538 = vpop.f32.mrf.mxu0
  %v539 = vadd.f32 %v496, %v538
  %v540 = vpop.f32.mrf.mxu0
  %541 = vdwg.mxu0
  %v542 = vxor.u32 %v536, 2147483648
  %v543 = vxor.u32 %v539, 2147483648
  %v544 = vmul.f32 %v542, 1.442695
  %v545 = vpow.pop %v544
  %v546 = vmul.f32 %v543, 1.442695
  %v547 = vpow.pop %v546
  %v548 = vadd.f32 %v545, 1.0
  %v549 = vadd.f32 %v547, 1.0
  %v550 = vrcp.pop %v548
  %v551 = vmul.f32 1.0, %v550
  %v552 = vrcp.pop %v549
  %v553 = vmul.f32 1.0, %v552
  %554 = vst [vmem:[%s2] sm:$0xff] %v551
  %555 = vst [vmem:[%s2 + $0x8] sm:$0xff] %v553
  // Predicated region
  $region10: #{generic_profile_forward.1} parent=0 // pred_check
    _
  $region11: #{generic_profile_forward.1} parent=0 // pred_check_branch
    %557 = sbr.rel (0) target = $region13
  $region12: #{generic_profile_forward.1} parent=0 // pred_region
    _
  $region13: #{generic_profile_forward.1} parent=0 // pred_fallthru
    _
  // Predicated region
  $region14: #{generic_profile_forward.1} parent=0 // pred_check
    _
  $region15: #{generic_profile_forward.1} parent=0 // pred_check_branch
    %559 = sbr.rel (0) target = $region17
  $region16: #{generic_profile_forward.1} parent=0 // pred_region
    _
  $region17: #{generic_profile_forward.1} parent=0 // pred_fallthru
    _

</llo_original>
